<compile_context>
chip_gen: v6e
topology: v6e:2x2x1
jax: 0.10.0
libtpu: 0.0.40
codegen_flags: <defaults>
</compile_context>

<pallas_src>
import functools

import jax
import jax.numpy as jnp
from jax import lax
from jax.experimental import pallas as pl
from jax.experimental.pallas import tpu as pltpu

EPS = 1e-5


def critic_kernel(x_ref, w1_ref, b1_ref, w3_ref, b3_ref, o_ref, *, lane_chunk):
    """One batch tile.

    x_ref : (block_batch, in_dim) bf16   natural layout (batch on sublanes)
    w1_ref: (H, in_dim)           bf16
    b1_ref: (H, 1)                f32
    w3_ref: (H, 1)                f32
    b3_ref: (1, 1)                f32    scalar bias in SMEM
    o_ref : (1, block_batch)      f32    lane-dense output (batch on lanes)
    """
    w1 = w1_ref[...]
    b1 = b1_ref[...]
    w3 = w3_ref[...]
    b3 = b3_ref[0, 0]

    block_batch = x_ref.shape[0]
    n_chunks = block_batch // lane_chunk          # static Python int

    def chunk_body(c, carry):
        start = pl.multiple_of(c * lane_chunk, lane_chunk)
        x_chunk = x_ref[pl.ds(start, lane_chunk), :]          # (chunk, in_dim) bf16

        # Linear 1 on the MXU: w1 @ x_chunk.T, bf16 operands / f32 accumulation.
        # Batch (chunk) ends up on the 128-lane axis.
        h = lax.dot_general(
            w1, x_chunk,
            dimension_numbers=(((1,), (1,)), ((), ())),
            preferred_element_type=jnp.float32) + b1          # (H, chunk) f32

        # InstanceNorm1d semantics for a 2-D input: per batch element (column here) over
        # the hidden (sublane) axis, biased variance, eps=1e-5, no affine.
        mean = jnp.mean(h, axis=0, keepdims=True)             # (1, chunk)
        centered = h - mean
        var = jnp.mean(centered * centered, axis=0, keepdims=True)
        h = centered * lax.rsqrt(var + EPS)

        # ReLU (VPU).
        h = jnp.maximum(h, 0.0)

        # Linear 2 (hidden -> 1): VPU multiply + cross-sublane sum; the result is already
        # lane-dense (1, chunk).
        out = jnp.sum(h * w3, axis=0, keepdims=True) + b3
        o_ref[:, pl.ds(start, lane_chunk)] = out.astype(o_ref.dtype)
        return carry

    # Short, fixed trip count: unrolled fori_loop keeps LLO scheduler visibility while
    # the chunking bounds vreg live ranges.
    lax.fori_loop(0, n_chunks, chunk_body, 0, unroll=True)


@functools.partial(jax.jit, static_argnames=("block_batch", "lane_chunk"))
def _critic_forward(x, w1, b1, w3, b3, *, block_batch, lane_chunk):
    B, in_dim = x.shape
    hidden = w1.shape[0]

    n_tiles = pl.cdiv(B, block_batch)
    b_pad = n_tiles * block_batch

    # bf16 activations in natural (B, in_dim) layout; cast + pad fuse into one pass.
    x_bf = x.astype(jnp.bfloat16)
    if b_pad != B:
        x_bf = jnp.pad(x_bf, ((0, b_pad - B), (0, 0)))
    w1_bf = w1.astype(jnp.bfloat16)

    kernel = functools.partial(critic_kernel, lane_chunk=lane_chunk)

    out_t = pl.pallas_call(
        kernel,
        out_shape=jax.ShapeDtypeStruct((1, b_pad), jnp.float32),
        grid_spec=pltpu.PrefetchScalarGridSpec(
            num_scalar_prefetch=0,
            grid=(n_tiles,),
            in_specs=[
                # Batch-tiled activations, natural layout, bf16.
                # (If profiling on v5e shows exposed DMA, add
                #  pipeline_mode=pl.Buffered(3) here; default depth is fine elsewhere.)
                pl.BlockSpec((block_batch, in_dim), lambda i: (i, 0)),
                # Weights / biases: constant index_map -> VMEM-resident across tiles.
                pl.BlockSpec((hidden, in_dim), lambda i: (0, 0)),
                pl.BlockSpec((hidden, 1), lambda i: (0, 0)),
                pl.BlockSpec((hidden, 1), lambda i: (0, 0)),
                # Single scalar bias lives in SMEM.
                pl.BlockSpec(memory_space=pltpu.SMEM),
            ],
            out_specs=pl.BlockSpec((1, block_batch), lambda i: (0, i)),
        ),
        compiler_params=pltpu.CompilerParams(
            dimension_semantics=("parallel",)),
        cost_estimate=pl.CostEstimate(
            flops=2 * b_pad * in_dim * hidden + 10 * b_pad * hidden,
            transcendentals=b_pad,
            bytes_accessed=(2 * in_dim * b_pad          # bf16 x
                            + 2 * hidden * in_dim       # bf16 w1
                            + 4 * (2 * hidden + 1)      # f32 b1, w3, b3
                            + 4 * b_pad)),              # f32 output
    )(x_bf, w1_bf, b1, w3, b3)

    return jnp.transpose(out_t[:, :B])                            # (B, 1)


def _choose_block_batch(B, *, lane_chunk=256, max_block=2048):
    """Pick the (static) batch-tile size.

    As large as possible (amortizes the per-grid-step pipeline overhead), but:
      * adaptive to B so small / ragged batches are not padded up to a huge fixed tile,
      * keeps >= 2 grid steps when there is enough work so the "parallel" batch axis can
        still be sharded across v7x's two TensorCores (harmless on v5e/v6e).
    """
    n_chunks = -(-B // lane_chunk)                 # batch size in lane_chunk granules
    max_cpb = max(max_block // lane_chunk, 1)      # chunks per block at the cap
    if n_chunks <= max_cpb:
        cpb = n_chunks if n_chunks <= 1 else -(-n_chunks // 2)   # split into >= 2 tiles
    else:
        cpb = max_cpb
    return cpb * lane_chunk


def critic_forward(x, w1, b1, w3, b3, *, lane_chunk=256, max_block=2048):
    """x: (B, state+action). w1: (H, in_dim). b1: (H, 1). w3: (H, 1). b3: (1, 1)."""
    block_batch = _choose_block_batch(x.shape[0], lane_chunk=lane_chunk,
                                      max_block=max_block)
    return _critic_forward(x, w1, b1, w3, b3,
                           block_batch=block_batch, lane_chunk=lane_chunk)


def init_params(key, state_size, action_size, hidden_size):
    """Deterministic PyTorch-style Linear init: U(-1/sqrt(fan_in), 1/sqrt(fan_in))."""
    in_dim = state_size + action_size
    k1, k2, k3, k4 = jax.random.split(key, 4)
    bound1 = 1.0 / jnp.sqrt(in_dim)
    w1 = jax.random.uniform(k1, (hidden_size, in_dim), jnp.float32, -bound1, bound1)
    b1 = jax.random.uniform(k2, (hidden_size,), jnp.float32, -bound1, bound1)
    bound3 = 1.0 / jnp.sqrt(hidden_size)
    w3 = jax.random.uniform(k3, (1, hidden_size), jnp.float32, -bound3, bound3)
    b3 = jax.random.uniform(k4, (1,), jnp.float32, -bound3, bound3)
    # Kernel-ready layouts: per-hidden-unit params as column vectors, (1,1) scalar bias.
    return (w1,
            b1.reshape(hidden_size, 1),
            w3.reshape(hidden_size, 1),    # (1, H) -> (H, 1)
            b3.reshape(1, 1))


def reference_forward(x, w1, b1, w3, b3, *, bf16_matmul=True):
    """Pure-JAX reference in the standard (B, features) orientation."""
    xf = x.astype(jnp.float32)
    if bf16_matmul:
        h = jnp.dot(xf.astype(jnp.bfloat16), jnp.transpose(w1).astype(jnp.bfloat16),
                    preferred_element_type=jnp.float32)
    else:
        h = xf @ jnp.transpose(w1)
    h = h + jnp.transpose(b1)                                     # (B, H)
    mean = jnp.mean(h, axis=-1, keepdims=True)
    var = jnp.mean((h - mean) ** 2, axis=-1, keepdims=True)
    h = (h - mean) / jnp.sqrt(var + EPS)
    h = jnp.maximum(h, 0.0)
    return h @ w3 + jnp.transpose(b3)                             # (B, 1)


if __name__ == "__main__":
    state_size, action_size, hidden_size = 24, 8, 32
    # Non-multiple batch: exercises padding and yields two 256-wide tiles (2 parallel
    # grid steps, so the v7x megacore path is covered too).
    batch = 300

    key = jax.random.PRNGKey(0)
    kx, kp = jax.random.split(key)
    x = jax.random.normal(kx, (batch, state_size + action_size), jnp.float32)
    w1, b1, w3, b3 = init_params(kp, state_size, action_size, hidden_size)

    out = critic_forward(x, w1, b1, w3, b3)
    out = jax.block_until_ready(out)
    assert out.shape == (batch, 1)

    # Tight check against a reference that uses the same bf16 MXU operands.
    ref_bf16 = reference_forward(x, w1, b1, w3, b3, bf16_matmul=True)
    assert jnp.allclose(out, ref_bf16, atol=1e-3, rtol=1e-3), (
        float(jnp.max(jnp.abs(out - ref_bf16))))

    # Looser sanity check against the pure-f32 reference (only bf16 first-matmul error).
    ref_f32 = reference_forward(x, w1, b1, w3, b3, bf16_matmul=False)
    assert jnp.allclose(out, ref_f32, atol=5e-2, rtol=5e-2), (
        float(jnp.max(jnp.abs(out - ref_f32))))

    print("KERNEL_OK")
</pallas_src>

<mosaic_0001>
module attributes {stable_mosaic.version = 11 : i64} {
  func.func @critic_kernel(%arg0: i32, %arg1: memref<256x32xbf16, #tpu.memory_space<vmem>>, %arg2: memref<32x32xbf16, #tpu.memory_space<vmem>>, %arg3: memref<32x1xf32, #tpu.memory_space<vmem>>, %arg4: memref<32x1xf32, #tpu.memory_space<vmem>>, %arg5: memref<1x1xf32, #tpu.memory_space<smem>>, %arg6: memref<1x256xf32, #tpu.memory_space<vmem>>) attributes {dimension_semantics = [#tpu.dimension_semantics<parallel>], iteration_bounds = array<i64: 2>, scalar_prefetch = 0 : i64, scratch_operands = 0 : i64, tpu.core_type = #tpu.core_type<tc>, window_params = [{transform_indices = @transform_0, window_bounds = array<i64: 256, 32>}, {pipeline_mode = #tpu.pipeline_mode<synchronous>, transform_indices = @transform_1, window_bounds = array<i64: 32, 32>}, {pipeline_mode = #tpu.pipeline_mode<synchronous>, transform_indices = @transform_2, window_bounds = array<i64: 32, 1>}, {pipeline_mode = #tpu.pipeline_mode<synchronous>, transform_indices = @transform_3, window_bounds = array<i64: 32, 1>}, {transform_indices = @transform_4, window_bounds = array<i64: 1, 1>}, {transform_indices = @transform_5, window_bounds = array<i64: 1, 256>}]} {
    %c0 = arith.constant 0 : index
    %c0_0 = arith.constant 0 : index
    %0 = vector.load %arg2[%c0, %c0_0] : memref<32x32xbf16, #tpu.memory_space<vmem>>, vector<32x32xbf16>
    %c0_1 = arith.constant 0 : index
    %c0_2 = arith.constant 0 : index
    %1 = vector.load %arg3[%c0_1, %c0_2] : memref<32x1xf32, #tpu.memory_space<vmem>>, vector<32x1xf32>
    %c0_3 = arith.constant 0 : index
    %c0_4 = arith.constant 0 : index
    %2 = vector.load %arg4[%c0_3, %c0_4] : memref<32x1xf32, #tpu.memory_space<vmem>>, vector<32x1xf32>
    %c0_5 = arith.constant 0 : index
    %c0_6 = arith.constant 0 : index
    %3 = memref.load %arg5[%c0_5, %c0_6] : memref<1x1xf32, #tpu.memory_space<smem>>
    %c0_i32 = arith.constant 0 : i32
    %c256_i32 = arith.constant 256 : i32
    %4 = arith.muli %c0_i32, %c256_i32 : i32
    %5 = tpu.assume_multiple %4, 256 : i32
    %6 = arith.index_cast %5 : i32 to index
    %c0_7 = arith.constant 0 : index
    %7 = vector.load %arg1[%6, %c0_7] : memref<256x32xbf16, #tpu.memory_space<vmem>>, vector<256x32xbf16>
    %cst = arith.constant dense<0.000000e+00> : vector<32x256xf32>
    %8 = tpu.matmul %0, %7, %cst {dimension_numbers = #tpu.dot_dimension_numbers<[1], [1], [0], [0], [0, 0, 1, 0], [], []>} : vector<32x32xbf16>, vector<256x32xbf16>, vector<32x256xf32> -> vector<32x256xf32>
    %9 = vector.broadcast %1 : vector<32x1xf32> to vector<32x256xf32>
    %10 = arith.addf %8, %9 : vector<32x256xf32>
    %cst_8 = arith.constant dense<0.000000e+00> : vector<256xf32>
    %11 = vector.multi_reduction <add>, %10, %cst_8 [0] : vector<32x256xf32> to vector<256xf32>
    %12 = vector.shape_cast %11 : vector<256xf32> to vector<1x256xf32>
    %cst_9 = arith.constant 3.200000e+01 : f32
    %13 = vector.broadcast %cst_9 : f32 to vector<1x256xf32>
    %14 = arith.divf %12, %13 : vector<1x256xf32>
    %15 = vector.broadcast %14 : vector<1x256xf32> to vector<32x256xf32>
    %16 = arith.subf %10, %15 : vector<32x256xf32>
    %17 = arith.mulf %16, %16 : vector<32x256xf32>
    %cst_10 = arith.constant dense<0.000000e+00> : vector<256xf32>
    %18 = vector.multi_reduction <add>, %17, %cst_10 [0] : vector<32x256xf32> to vector<256xf32>
    %19 = vector.shape_cast %18 : vector<256xf32> to vector<1x256xf32>
    %cst_11 = arith.constant 3.200000e+01 : f32
    %20 = vector.broadcast %cst_11 : f32 to vector<1x256xf32>
    %21 = arith.divf %19, %20 : vector<1x256xf32>
    %cst_12 = arith.constant 9.99999974E-6 : f32
    %22 = vector.broadcast %cst_12 : f32 to vector<1x256xf32>
    %23 = arith.addf %21, %22 : vector<1x256xf32>
    %24 = math.rsqrt %23 : vector<1x256xf32>
    %25 = vector.broadcast %24 : vector<1x256xf32> to vector<32x256xf32>
    %26 = arith.mulf %16, %25 : vector<32x256xf32>
    %cst_13 = arith.constant 0.000000e+00 : f32
    %27 = vector.broadcast %cst_13 : f32 to vector<32x256xf32>
    %28 = arith.maximumf %26, %27 : vector<32x256xf32>
    %29 = vector.broadcast %2 : vector<32x1xf32> to vector<32x256xf32>
    %30 = arith.mulf %28, %29 : vector<32x256xf32>
    %cst_14 = arith.constant dense<0.000000e+00> : vector<256xf32>
    %31 = vector.multi_reduction <add>, %30, %cst_14 [0] : vector<32x256xf32> to vector<256xf32>
    %32 = vector.shape_cast %31 : vector<256xf32> to vector<1x256xf32>
    %33 = vector.broadcast %3 : f32 to vector<1x256xf32>
    %34 = arith.addf %32, %33 : vector<1x256xf32>
    %c0_15 = arith.constant 0 : index
    %35 = arith.index_cast %5 : i32 to index
    %36 = vector.load %arg6[%c0_15, %35] : memref<1x256xf32, #tpu.memory_space<vmem>>, vector<1x256xf32>
    tpu.vector_store %arg6[%c0_15, %35], %34 {strides = array<i32>} : memref<1x256xf32, #tpu.memory_space<vmem>>, vector<1x256xf32>,
    %c1_i32 = arith.constant 1 : i32
    return
  }
  func.func @transform_0(%arg0: i32) -> (i32, i32) {
    %c0_i32 = arith.constant 0 : i32
    %c0_i32_0 = arith.constant 0 : i32
    return %arg0, %c0_i32 : i32, i32
  }
  func.func @transform_1(%arg0: i32) -> (i32, i32) {
    %c0_i32 = arith.constant 0 : i32
    %c0_i32_0 = arith.constant 0 : i32
    %c0_i32_1 = arith.constant 0 : i32
    return %c0_i32, %c0_i32_0 : i32, i32
  }
  func.func @transform_2(%arg0: i32) -> (i32, i32) {
    %c0_i32 = arith.constant 0 : i32
    %c0_i32_0 = arith.constant 0 : i32
    %c0_i32_1 = arith.constant 0 : i32
    return %c0_i32, %c0_i32_0 : i32, i32
  }
  func.func @transform_3(%arg0: i32) -> (i32, i32) {
    %c0_i32 = arith.constant 0 : i32
    %c0_i32_0 = arith.constant 0 : i32
    %c0_i32_1 = arith.constant 0 : i32
    return %c0_i32, %c0_i32_0 : i32, i32
  }
  func.func @transform_4(%arg0: i32) -> (i32, i32) {
    %c0_i32 = arith.constant 0 : i32
    %c0_i32_0 = arith.constant 0 : i32
    %c0_i32_1 = arith.constant 0 : i32
    return %c0_i32, %c0_i32_0 : i32, i32
  }
  func.func @transform_5(%arg0: i32) -> (i32, i32) {
    %c0_i32 = arith.constant 0 : i32
    %c0_i32_0 = arith.constant 0 : i32
    return %c0_i32, %arg0 : i32, i32
  }
}

</mosaic_0001>

<llo_original>
// kernel: _critic_forward.1
$region0: #{_critic_forward.1}
  #allocation0 [shape = 'u32[]', space=smem, size = 0x4, offset = 0x4, fixed_abs, tag = 'smem constant byte address 0x4 - core index']
  #allocation1 [shape = 'u32[144,128]{1,0:T(1,128)}', space=vmem, size = 0x12000, scoped, tag = 'internal scratch']
  #allocation2 [shape = 'f32[1,1]{1,0:T(1,128)S(6)}', space=smem, size = 0x200, scoped, tag = 'scoped memory for _critic_forward.1']
  %s0 = inlined_call_operand.vmem [shape: bf16[512,32], index: 0, kind: input, shape index: {}]
  %s1 = inlined_call_operand.vmem [shape: bf16[32,32], index: 1, kind: input, shape index: {}]
  %s2 = inlined_call_operand.vmem [shape: f32[32,1], index: 2, kind: input, shape index: {}]
  %s3 = inlined_call_operand.vmem [shape: f32[32,1], index: 3, kind: input, shape index: {}]
  %s4 = inlined_call_operand.<no memory space> [shape: f32[1,1], index: 4, kind: input, shape index: {}]
  %s5 = inlined_call_operand.vmem [shape: f32[1,512], index: 5, kind: output, shape index: {}]
  %s6 = sld [smem:[#allocation0]]
  $region53: #{_critic_forward.1} parent=0
    _
  %s8 = ssub.s32 1, %s6
  %s9 = scalar_select 0, %s8, %s6
  %10 = sst [smem:[#allocation2]] %s4
  loop: start=0, step=1, limit=4
  $region2: #{_critic_forward.1} parent=0 // loop_pre_header
    _
  $region3: #{_critic_forward.1} parent=0 // loop_header
    %s12 = sphi 0, %s16
    %p13 = scmp.ge.s32.totalorder %s12, 4
    %s22 = sphi 0, %s24
    %s25 = sphi 0, %s22
    %s26 = sphi 0, %s25
    %s42 = sphi 0, %s26
    %s46 = sphi 0, %s46
    %s48 = sphi 0, %s46
    %s49 = sphi 0, %s48
    %s63 = sphi 0, %s49
    %s67 = sphi 0, %s67
    %s69 = sphi 0, %s67
    %s70 = sphi 0, %s69
    %s84 = sphi 0, %s70
    %s88 = sphi 0, %s88
    %s90 = sphi 0, %s88
    %s91 = sphi 0, %s90
    %s105 = sphi 0, %s91
    %s109 = sphi 0, %s109
    %s111 = sphi 0, %s109
    %s112 = sphi 0, %s111
    %s126 = sphi 0, %s112
    %s132 = sphi 0, %s134
    %s135 = sphi 0, %s132
    %s136 = sphi 0, %s135
    %s152 = sphi 0, %s136
  $region4: #{_critic_forward.1} parent=0 // loop_header_branch
    %15 = sbr.rel (%p13) target = $region8
  $region5: #{_critic_forward.1} parent=0 // loop_body
    %s17 = ssub.s32 %s12, 1
    %s18 = ssub.s32 %s12, 2
    %s19 = sadd.s32 %s12, 1
    %s20 = ssub.s32 %s12, %s19
    %p21 = scmp.eq.s32.totalorder %s20, 0
    %s23 = sadd.s32 %s22, 1
    %s24 = scalar_select %p21, %s22, %s23
    %p27 = pneg %p21
    %p28 = scmp.eq.s32.totalorder %s12, 1
    %p29 = por %p27, %p28
    %p30 = scmp.ne.s32.totalorder %s22, %s25
    %p31 = scmp.eq.s32.totalorder %s12, 0
    %p32 = por %p30, %p31
    %p33 = scmp.ne.s32.totalorder %s22, %s25
    %p34 = scmp.eq.s32.totalorder %s17, 1
    %p35 = por %p33, %p34
    %p36 = scmp.ne.s32.totalorder %s25, %s26
    %p37 = scmp.eq.s32.totalorder %s17, 0
    %p38 = por %p36, %p37
    %p39 = scmp.ne.s32.totalorder %s25, %s26
    %p40 = scmp.eq.s32.totalorder %s18, 1
    %p41 = por %p39, %p40
    %p43 = scmp.ne.s32.totalorder %s26, %s42
    %p44 = scmp.eq.s32.totalorder %s18, 0
    %p45 = por %p43, %p44
    %s47 = sadd.s32 %s46, 1
    %p50 = scmp.eq.s32.totalorder %s12, 1
    %p51 = scmp.ne.s32.totalorder %s46, %s48
    %p52 = scmp.eq.s32.totalorder %s12, 0
    %p53 = por %p51, %p52
    %p54 = scmp.ne.s32.totalorder %s46, %s48
    %p55 = scmp.eq.s32.totalorder %s17, 1
    %p56 = por %p54, %p55
    %p57 = scmp.ne.s32.totalorder %s48, %s49
    %p58 = scmp.eq.s32.totalorder %s17, 0
    %p59 = por %p57, %p58
    %p60 = scmp.ne.s32.totalorder %s48, %s49
    %p61 = scmp.eq.s32.totalorder %s18, 1
    %p62 = por %p60, %p61
    %p64 = scmp.ne.s32.totalorder %s49, %s63
    %p65 = scmp.eq.s32.totalorder %s18, 0
    %p66 = por %p64, %p65
    %s68 = sadd.s32 %s67, 1
    %p71 = scmp.eq.s32.totalorder %s12, 1
    %p72 = scmp.ne.s32.totalorder %s67, %s69
    %p73 = scmp.eq.s32.totalorder %s12, 0
    %p74 = por %p72, %p73
    %p75 = scmp.ne.s32.totalorder %s67, %s69
    %p76 = scmp.eq.s32.totalorder %s17, 1
    %p77 = por %p75, %p76
    %p78 = scmp.ne.s32.totalorder %s69, %s70
    %p79 = scmp.eq.s32.totalorder %s17, 0
    %p80 = por %p78, %p79
    %p81 = scmp.ne.s32.totalorder %s69, %s70
    %p82 = scmp.eq.s32.totalorder %s18, 1
    %p83 = por %p81, %p82
    %p85 = scmp.ne.s32.totalorder %s70, %s84
    %p86 = scmp.eq.s32.totalorder %s18, 0
    %p87 = por %p85, %p86
    %s89 = sadd.s32 %s88, 1
    %p92 = scmp.eq.s32.totalorder %s12, 1
    %p93 = scmp.ne.s32.totalorder %s88, %s90
    %p94 = scmp.eq.s32.totalorder %s12, 0
    %p95 = por %p93, %p94
    %p96 = scmp.ne.s32.totalorder %s88, %s90
    %p97 = scmp.eq.s32.totalorder %s17, 1
    %p98 = por %p96, %p97
    %p99 = scmp.ne.s32.totalorder %s90, %s91
    %p100 = scmp.eq.s32.totalorder %s17, 0
    %p101 = por %p99, %p100
    %p102 = scmp.ne.s32.totalorder %s90, %s91
    %p103 = scmp.eq.s32.totalorder %s18, 1
    %p104 = por %p102, %p103
    %p106 = scmp.ne.s32.totalorder %s91, %s105
    %p107 = scmp.eq.s32.totalorder %s18, 0
    %p108 = por %p106, %p107
    %s110 = sadd.s32 %s109, 1
    %p113 = scmp.eq.s32.totalorder %s12, 1
    %p114 = scmp.ne.s32.totalorder %s109, %s111
    %p115 = scmp.eq.s32.totalorder %s12, 0
    %p116 = por %p114, %p115
    %p117 = scmp.ne.s32.totalorder %s109, %s111
    %p118 = scmp.eq.s32.totalorder %s17, 1
    %p119 = por %p117, %p118
    %p120 = scmp.ne.s32.totalorder %s111, %s112
    %p121 = scmp.eq.s32.totalorder %s17, 0
    %p122 = por %p120, %p121
    %p123 = scmp.ne.s32.totalorder %s111, %s112
    %p124 = scmp.eq.s32.totalorder %s18, 1
    %p125 = por %p123, %p124
    %p127 = scmp.ne.s32.totalorder %s112, %s126
    %p128 = scmp.eq.s32.totalorder %s18, 0
    %p129 = por %p127, %p128
    %s130 = ssub.s32 %s12, %s19
    %p131 = scmp.eq.s32.totalorder %s130, 0
    %s133 = sadd.s32 %s132, 1
    %s134 = scalar_select %p131, %s132, %s133
    %p137 = pneg %p131
    %p138 = scmp.eq.s32.totalorder %s12, 1
    %p139 = por %p137, %p138
    %p140 = scmp.ne.s32.totalorder %s132, %s135
    %p141 = scmp.eq.s32.totalorder %s12, 0
    %p142 = por %p140, %p141
    %p143 = scmp.ne.s32.totalorder %s132, %s135
    %p144 = scmp.eq.s32.totalorder %s17, 1
    %p145 = por %p143, %p144
    %p146 = scmp.ne.s32.totalorder %s135, %s136
    %p147 = scmp.eq.s32.totalorder %s17, 0
    %p148 = por %p146, %p147
    %p149 = scmp.ne.s32.totalorder %s135, %s136
    %p150 = scmp.eq.s32.totalorder %s18, 1
    %p151 = por %p149, %p150
    %p153 = scmp.ne.s32.totalorder %s136, %s152
    %p154 = scmp.eq.s32.totalorder %s18, 0
    %p155 = por %p153, %p154
    %p156 = scmp.le.s32.totalorder 1, %s12
    %p157 = scmp.lt.s32.totalorder %s12, 3
    %p158 = pnand %p156, %p157
    %p159 = pneg %p158
    // Predicated region
    $region9: #{_critic_forward.1} parent=5 // pred_check
      _
    $region10: #{_critic_forward.1} parent=5 // pred_check_branch
      %161 = sbr.rel (%p158) target = $region12
    $region11: #{_critic_forward.1} parent=5 // pred_region
      %s162 = ssub.s32 %s12, 1
      // Predicated region
      $region13: #{_critic_forward.1} parent=11 // pred_check
        %p163 = pneg %p59
      $region14: #{_critic_forward.1} parent=11 // pred_check_branch
        %165 = sbr.rel (%p163) target = $region16
      $region15: #{_critic_forward.1} parent=11 // pred_region
        _
      $region16: #{_critic_forward.1} parent=11 // pred_fallthru
        _
      // Predicated region
      $region17: #{_critic_forward.1} parent=11 // pred_check
        %p166 = pneg %p80
      $region18: #{_critic_forward.1} parent=11 // pred_check_branch
        %168 = sbr.rel (%p166) target = $region20
      $region19: #{_critic_forward.1} parent=11 // pred_region
        _
      $region20: #{_critic_forward.1} parent=11 // pred_fallthru
        _
      // Predicated region
      $region21: #{_critic_forward.1} parent=11 // pred_check
        %p169 = pneg %p101
      $region22: #{_critic_forward.1} parent=11 // pred_check_branch
        %171 = sbr.rel (%p169) target = $region24
      $region23: #{_critic_forward.1} parent=11 // pred_region
        _
      $region24: #{_critic_forward.1} parent=11 // pred_fallthru
        _
      // Predicated region
      $region25: #{_critic_forward.1} parent=11 // pred_check
        %p172 = pneg %p122
      $region26: #{_critic_forward.1} parent=11 // pred_check_branch
        %174 = sbr.rel (%p172) target = $region28
      $region27: #{_critic_forward.1} parent=11 // pred_region
        _
      $region28: #{_critic_forward.1} parent=11 // pred_fallthru
        _
    $region12: #{_critic_forward.1} parent=5 // pred_fallthru
      _
    %p175 = scmp.lt.s32.totalorder %s12, 2
    // Predicated region
    $region29: #{_critic_forward.1} parent=5 // pred_check
      %p176 = pneg %p175
    $region30: #{_critic_forward.1} parent=5 // pred_check_branch
      %178 = sbr.rel (%p176) target = $region32
    $region31: #{_critic_forward.1} parent=5 // pred_region
      // Predicated region
      $region33: #{_critic_forward.1} parent=31 // pred_check
        %p179 = pneg %p32
      $region34: #{_critic_forward.1} parent=31 // pred_check_branch
        %181 = sbr.rel (%p179) target = $region36
      $region35: #{_critic_forward.1} parent=31 // pred_region
        %s182 = smul.u32 32, %s12
        %p183 = scmp.lt.s32.totalorder %s182, 63
        %s184 = scalar_select %p183, %s182, 63
        %s185 = smul.addr %s184, 4
        %s186 = scalar_lea.vmem %s0, %s185
        %s187 = smul.u32 32, %s12
      $region36: #{_critic_forward.1} parent=31 // pred_fallthru
        _
    $region32: #{_critic_forward.1} parent=5 // pred_fallthru
      _
    %p188 = scmp.le.s32.totalorder 1, %s12
    %p189 = scmp.lt.s32.totalorder %s12, 3
    %p190 = pnand %p188, %p189
    %p191 = pneg %p190
    // Predicated region
    $region37: #{_critic_forward.1} parent=5 // pred_check
      _
    $region38: #{_critic_forward.1} parent=5 // pred_check_branch
      %193 = sbr.rel (%p190) target = $region40
    $region39: #{_critic_forward.1} parent=5 // pred_region
      %s194 = ssub.s32 %s12, 1
      %s195 = smul.u32 32, %s17
      %p196 = scmp.lt.s32.totalorder %s195, 63
      %s197 = scalar_select %p196, %s195, 63
      %s198 = smul.addr %s197, 4
      %s199 = scalar_lea.vmem %s0, %s198
      %p200 = pneg %p38
      %p201 = pneg %p35
      %p202 = pneg %p59
      %p203 = pneg %p56
      %p204 = pneg %p80
      %p205 = pneg %p77
      %p206 = pneg %p101
      %p207 = pneg %p98
      %p208 = pneg %p122
      %p209 = pneg %p119
      %p210 = pneg %p148
      %p211 = pneg %p145
      %s212 = smul.u32 2, %s17
      %p213 = scmp.lt.s32.totalorder %s212, 3
      %s214 = scalar_select %p213, %s212, 3
      %s215 = scalar_lea.vmem %s5, %s214
      %s216 = smul.u32 32, %s17
      %p217 = scmp.lt.s32.totalorder %s216, 63
      %s218 = scalar_select %p217, %s216, 63
      %s219 = smul.addr %s218, 4
      %s220 = scalar_lea.vmem %s0, %s219
      %s221 = smul.u32 32, %s17
      %s222 = smul.u32 2, %s17
      %p223 = scmp.lt.s32.totalorder %s222, 3
      %s224 = scalar_select %p223, %s222, 3
      %s225 = scalar_lea.vmem %s5, %s224
      %s226 = smul.u32 2, %s17
      %v228 = vld [vmem:[%s1] sm:$0xf]
      %v229 = vld [vmem:[%s1 + $0x4] sm:$0xf]
      %v230 = vld [vmem:[%s1 + $0x8] sm:$0xf]
      %v231 = vld [vmem:[%s1 + $0xc] sm:$0xf]
      %v232 = vld [vmem:[%s2] sm:$0xff]
      %v233 = vld [vmem:[%s2 + $0x8] sm:$0xff]
      %v234 = vld [vmem:[%s2 + $0x10] sm:$0xff]
      %v235 = vld [vmem:[%s2 + $0x18] sm:$0xff]
      %v236 = vld [vmem:[%s3] sm:$0xff]
      %v237 = vld [vmem:[%s3 + $0x8] sm:$0xff]
      %v238 = vld [vmem:[%s3 + $0x10] sm:$0xff]
      %v239 = vld [vmem:[%s3 + $0x18] sm:$0xff]
      %s240 = sld [smem:[#allocation2]]
      %v241 = vld [vmem:[%s220] sm:$0xf]
      %v242 = vld [vmem:[%s220 + $0x4] sm:$0xf]
      %v243 = vld [vmem:[%s220 + $0x8] sm:$0xf]
      %v244 = vld [vmem:[%s220 + $0xc] sm:$0xf]
      %v245 = vld [vmem:[%s220 + $0x10] sm:$0xf]
      %v246 = vld [vmem:[%s220 + $0x14] sm:$0xf]
      %v247 = vld [vmem:[%s220 + $0x18] sm:$0xf]
      %v248 = vld [vmem:[%s220 + $0x1c] sm:$0xf]
      %v249 = vld [vmem:[%s220 + $0x20] sm:$0xf]
      %v250 = vld [vmem:[%s220 + $0x24] sm:$0xf]
      %v251 = vld [vmem:[%s220 + $0x28] sm:$0xf]
      %v252 = vld [vmem:[%s220 + $0x2c] sm:$0xf]
      %v253 = vld [vmem:[%s220 + $0x30] sm:$0xf]
      %v254 = vld [vmem:[%s220 + $0x34] sm:$0xf]
      %v255 = vld [vmem:[%s220 + $0x38] sm:$0xf]
      %v256 = vld [vmem:[%s220 + $0x3c] sm:$0xf]
      %v257 = vld [vmem:[%s220 + $0x40] sm:$0xf]
      %v258 = vld [vmem:[%s220 + $0x44] sm:$0xf]
      %v259 = vld [vmem:[%s220 + $0x48] sm:$0xf]
      %v260 = vld [vmem:[%s220 + $0x4c] sm:$0xf]
      %v261 = vld [vmem:[%s220 + $0x50] sm:$0xf]
      %v262 = vld [vmem:[%s220 + $0x54] sm:$0xf]
      %v263 = vld [vmem:[%s220 + $0x58] sm:$0xf]
      %v264 = vld [vmem:[%s220 + $0x5c] sm:$0xf]
      %v265 = vld [vmem:[%s220 + $0x60] sm:$0xf]
      %v266 = vld [vmem:[%s220 + $0x64] sm:$0xf]
      %v267 = vld [vmem:[%s220 + $0x68] sm:$0xf]
      %v268 = vld [vmem:[%s220 + $0x6c] sm:$0xf]
      %v269 = vld [vmem:[%s220 + $0x70] sm:$0xf]
      %v270 = vld [vmem:[%s220 + $0x74] sm:$0xf]
      %v271 = vld [vmem:[%s220 + $0x78] sm:$0xf]
      %v272 = vld [vmem:[%s220 + $0x7c] sm:$0xf]
      %274 = vset.pattern.permute.xlu0 0
      %275 = vperm.xlu0 %274, %v232
      %v276 = vpop.permute.xlu0 %275
      %279 = vset.pattern.permute.xlu0 0
      %280 = vperm.xlu0 %279, %v233
      %v281 = vpop.permute.xlu0 %280
      %284 = vset.pattern.permute.xlu0 0
      %285 = vperm.xlu0 %284, %v234
      %v286 = vpop.permute.xlu0 %285
      %289 = vset.pattern.permute.xlu0 0
      %290 = vperm.xlu0 %289, %v235
      %v291 = vpop.permute.xlu0 %290
      %v297 = vunpack.c.l.b16 %v228
      %v298 = vunpack.c.l.b16 %v229
      %v299 = vunpack.c.l.b16 %v230
      %v300 = vunpack.c.l.b16 %v231
      %v301 = vpack.c.b16 %v298, %v297
      %v302 = vpack.c.b16 %v300, %v299
      %v335 = vunpack.c.l.b16 %v241
      %v336 = vunpack.c.l.b16 %v242
      %v337 = vunpack.c.l.b16 %v243
      %v338 = vunpack.c.l.b16 %v244
      %v339 = vunpack.c.l.b16 %v245
      %v340 = vunpack.c.l.b16 %v246
      %v341 = vunpack.c.l.b16 %v247
      %v342 = vunpack.c.l.b16 %v248
      %v343 = vunpack.c.l.b16 %v249
      %v344 = vunpack.c.l.b16 %v250
      %v345 = vunpack.c.l.b16 %v251
      %v346 = vunpack.c.l.b16 %v252
      %v347 = vunpack.c.l.b16 %v253
      %v348 = vunpack.c.l.b16 %v254
      %v349 = vunpack.c.l.b16 %v255
      %v350 = vunpack.c.l.b16 %v256
      %v351 = vunpack.c.l.b16 %v257
      %v352 = vunpack.c.l.b16 %v258
      %v353 = vunpack.c.l.b16 %v259
      %v354 = vunpack.c.l.b16 %v260
      %v355 = vunpack.c.l.b16 %v261
      %v356 = vunpack.c.l.b16 %v262
      %v357 = vunpack.c.l.b16 %v263
      %v358 = vunpack.c.l.b16 %v264
      %v359 = vunpack.c.l.b16 %v265
      %v360 = vunpack.c.l.b16 %v266
      %v361 = vunpack.c.l.b16 %v267
      %v362 = vunpack.c.l.b16 %v268
      %v363 = vunpack.c.l.b16 %v269
      %v364 = vunpack.c.l.b16 %v270
      %v365 = vunpack.c.l.b16 %v271
      %v366 = vunpack.c.l.b16 %v272
      %v367 = vpack.c.b16 %v336, %v335
      %v368 = vpack.c.b16 %v338, %v337
      %v369 = vpack.c.b16 %v340, %v339
      %v370 = vpack.c.b16 %v342, %v341
      %v371 = vpack.c.b16 %v344, %v343
      %v372 = vpack.c.b16 %v346, %v345
      %v373 = vpack.c.b16 %v348, %v347
      %v374 = vpack.c.b16 %v350, %v349
      %v375 = vpack.c.b16 %v352, %v351
      %v376 = vpack.c.b16 %v354, %v353
      %v377 = vpack.c.b16 %v356, %v355
      %v378 = vpack.c.b16 %v358, %v357
      %v379 = vpack.c.b16 %v360, %v359
      %v380 = vpack.c.b16 %v362, %v361
      %v381 = vpack.c.b16 %v364, %v363
      %v382 = vpack.c.b16 %v366, %v365
      %vm383 = vcmask 261120
      %v385 = vsel %vm383, %v301, 0
      %v388 = vsel %vm383, %v302, 0
      %v391 = vsel %vm383, %v367, 0
      %v394 = vsel %vm383, %v368, 0
      %v397 = vsel %vm383, %v369, 0
      %v400 = vsel %vm383, %v370, 0
      %v403 = vsel %vm383, %v371, 0
      %v406 = vsel %vm383, %v372, 0
      %v409 = vsel %vm383, %v373, 0
      %v412 = vsel %vm383, %v374, 0
      %v415 = vsel %vm383, %v375, 0
      %v418 = vsel %vm383, %v376, 0
      %v421 = vsel %vm383, %v377, 0
      %v424 = vsel %vm383, %v378, 0
      %v427 = vsel %vm383, %v379, 0
      %v430 = vsel %vm383, %v380, 0
      %v433 = vsel %vm383, %v381, 0
      %v436 = vsel %vm383, %v382, 0
      %438 = vmatprep.subr.bf16.mxu0 0
      %439 = vmatpush1.bf16.xpose.msra.mxu0 %v412
      %440 = vmatprep.subr.bf16.mxu0 0
      %441 = vmatpush1.bf16.xpose.msra.mxu0 %v409
      %442 = vmatprep.subr.bf16.mxu0 0
      %443 = vmatpush1.bf16.xpose.msra.mxu0 %v406
      %444 = vmatprep.subr.bf16.mxu0 0
      %445 = vmatpush1.bf16.xpose.msra.mxu0 %v403
      %446 = vmatprep.subr.bf16.mxu0 0
      %447 = vmatpush1.bf16.xpose.msra.mxu0 %v400
      %448 = vmatprep.subr.bf16.mxu0 0
      %449 = vmatpush1.bf16.xpose.msra.mxu0 %v397
      %450 = vmatprep.subr.bf16.mxu0 0
      %451 = vmatpush1.bf16.xpose.msra.mxu0 %v394
      %452 = vmatprep.subr.bf16.mxu0 0
      %453 = vmatpush1.bf16.xpose.msra.mxu0 %v391
      %454 = vmatprep.subr.bf16.mxu0 0
      %455 = vmatpush2.bf16.xpose.msra.mxu0 %v436
      %456 = vmatprep.subr.bf16.mxu0 0
      %457 = vmatpush2.bf16.xpose.msra.mxu0 %v433
      %458 = vmatprep.subr.bf16.mxu0 0
      %459 = vmatpush2.bf16.xpose.msra.mxu0 %v430
      %460 = vmatprep.subr.bf16.mxu0 0
      %461 = vmatpush2.bf16.xpose.msra.mxu0 %v427
      %462 = vmatprep.subr.bf16.mxu0 0
      %463 = vmatpush2.bf16.xpose.msra.mxu0 %v424
      %464 = vmatprep.subr.bf16.mxu0 0
      %465 = vmatpush2.bf16.xpose.msra.mxu0 %v421
      %466 = vmatprep.subr.bf16.mxu0 0
      %467 = vmatpush2.bf16.xpose.msra.mxu0 %v418
      %468 = vmatprep.subr.bf16.mxu0 0
      %469 = vmatpush2.bf16.xpose.msra.mxu0 %v415
      %470 = vmatprep.mubr.bf16.mxu0 0
      %471 = vmatmul.mubr.bf16.gmra.mxu0 %v385
      %v472 = vpop.f32.mrf.mxu0
      %v473 = vadd.f32 %v276, %v472
      %v474 = vpop.f32.mrf.mxu0
      %v475 = vadd.f32 %v276, %v474
      %v476 = vpop.f32.mrf.mxu0
      %v477 = vadd.f32 %v281, %v476
      %v478 = vpop.f32.mrf.mxu0
      %v479 = vadd.f32 %v281, %v478
      %480 = vmatprep.mubr.bf16.mxu0 0
      %481 = vmatmul.mubr.bf16.gmra.mxu0 %v388
      %v482 = vpop.f32.mrf.mxu0
      %v483 = vadd.f32 %v286, %v482
      %v484 = vpop.f32.mrf.mxu0
      %v485 = vadd.f32 %v286, %v484
      %v486 = vpop.f32.mrf.mxu0
      %v487 = vadd.f32 %v291, %v486
      %v488 = vpop.f32.mrf.mxu0
      %v489 = vadd.f32 %v291, %v488
      %490 = vdwg.mxu0
      %v491 = vadd.f32 %v473, %v477
      %v492 = vadd.f32 %v491, %v483
      %v493 = vadd.f32 %v492, %v487
      %v494 = vrot.slane %v493, 4
      %v495 = vadd.f32 %v493, %v494
      %v496 = vrot.slane %v495, 2
      %v497 = vadd.f32 %v495, %v496
      %v498 = vrot.slane %v497, 1
      %v499 = vadd.f32 %v497, %v498
      %v500 = vadd.f32 %v475, %v479
      %v501 = vadd.f32 %v500, %v485
      %v502 = vadd.f32 %v501, %v489
      %v503 = vrot.slane %v502, 4
      %v504 = vadd.f32 %v502, %v503
      %v505 = vrot.slane %v504, 2
      %v506 = vadd.f32 %v504, %v505
      %v507 = vrot.slane %v506, 1
      %v508 = vadd.f32 %v506, %v507
      %v509 = vrcp.pop 32.0
      %v510 = vmul.f32 %v499, %v509
      %v511 = vmul.f32 %v508, %v509
      %v512 = vsub.f32 %v473, %v510
      %v513 = vsub.f32 %v475, %v511
      %v514 = vsub.f32 %v477, %v510
      %v515 = vsub.f32 %v479, %v511
      %v516 = vsub.f32 %v483, %v510
      %v517 = vsub.f32 %v485, %v511
      %v518 = vsub.f32 %v487, %v510
      %v519 = vsub.f32 %v489, %v511
      %v520 = vmul.f32 %v512, %v512
      %v521 = vmul.f32 %v513, %v513
      %v522 = vmul.f32 %v514, %v514
      %v523 = vmul.f32 %v515, %v515
      %v524 = vmul.f32 %v516, %v516
      %v525 = vmul.f32 %v517, %v517
      %v526 = vmul.f32 %v518, %v518
      %v527 = vmul.f32 %v519, %v519
      %v528 = vadd.f32 %v520, %v522
      %v529 = vadd.f32 %v528, %v524
      %v530 = vadd.f32 %v529, %v526
      %v531 = vrot.slane %v530, 4
      %v532 = vadd.f32 %v530, %v531
      %v533 = vrot.slane %v532, 2
      %v534 = vadd.f32 %v532, %v533
      %v535 = vrot.slane %v534, 1
      %v536 = vadd.f32 %v534, %v535
      %v537 = vadd.f32 %v521, %v523
      %v538 = vadd.f32 %v537, %v525
      %v539 = vadd.f32 %v538, %v527
      %v540 = vrot.slane %v539, 4
      %v541 = vadd.f32 %v539, %v540
      %v542 = vrot.slane %v541, 2
      %v543 = vadd.f32 %v541, %v542
      %v544 = vrot.slane %v543, 1
      %v545 = vadd.f32 %v543, %v544
      %v546 = vmul.f32 %v536, %v509
      %v547 = vmul.f32 %v545, %v509
      %v548 = vadd.f32 %v546, 1e-05
      %v549 = vadd.f32 %v547, 1e-05
      %v550 = vrsqrt.pop %v548
      %v551 = vrsqrt.pop %v549
      %v552 = vmul.f32 %v512, %v550
      %v553 = vmul.f32 %v513, %v551
      %v554 = vmul.f32 %v514, %v550
      %v555 = vmul.f32 %v515, %v551
      %v556 = vmul.f32 %v516, %v550
      %v557 = vmul.f32 %v517, %v551
      %v558 = vmul.f32 %v518, %v550
      %v559 = vmul.f32 %v519, %v551
      %v560 = vmax.f32 %v552, 0.0
      %v561 = vmax.f32 %v553, 0.0
      %v562 = vmax.f32 %v554, 0.0
      %v563 = vmax.f32 %v555, 0.0
      %v564 = vmax.f32 %v556, 0.0
      %v565 = vmax.f32 %v557, 0.0
      %v566 = vmax.f32 %v558, 0.0
      %v567 = vmax.f32 %v559, 0.0
      %569 = vset.pattern.permute.xlu0 0
      %570 = vperm.xlu0 %569, %v236
      %v571 = vpop.permute.xlu0 %570
      %574 = vset.pattern.permute.xlu0 0
      %575 = vperm.xlu0 %574, %v237
      %v576 = vpop.permute.xlu0 %575
      %579 = vset.pattern.permute.xlu0 0
      %580 = vperm.xlu0 %579, %v238
      %v581 = vpop.permute.xlu0 %580
      %584 = vset.pattern.permute.xlu0 0
      %585 = vperm.xlu0 %584, %v239
      %v586 = vpop.permute.xlu0 %585
      %v588 = vmul.f32 %v560, %v571
      %v589 = vmul.f32 %v561, %v571
      %v590 = vmul.f32 %v562, %v576
      %v591 = vmul.f32 %v563, %v576
      %v592 = vmul.f32 %v564, %v581
      %v593 = vmul.f32 %v565, %v581
      %v594 = vmul.f32 %v566, %v586
      %v595 = vmul.f32 %v567, %v586
      %v596 = vadd.f32 %v588, %v590
      %v597 = vadd.f32 %v596, %v592
      %v598 = vadd.f32 %v597, %v594
      %v599 = vrot.slane %v598, 4
      %v600 = vadd.f32 %v598, %v599
      %v601 = vrot.slane %v600, 2
      %v602 = vadd.f32 %v600, %v601
      %v603 = vrot.slane %v602, 1
      %v604 = vadd.f32 %v602, %v603
      %v605 = vadd.f32 %v589, %v591
      %v606 = vadd.f32 %v605, %v593
      %v607 = vadd.f32 %v606, %v595
      %v608 = vrot.slane %v607, 4
      %v609 = vadd.f32 %v607, %v608
      %v610 = vrot.slane %v609, 2
      %v611 = vadd.f32 %v609, %v610
      %v612 = vrot.slane %v611, 1
      %v613 = vadd.f32 %v611, %v612
      %v614 = vstv %s240
      %v615 = vadd.f32 %v604, %v614
      %v616 = vadd.f32 %v613, %v614
      %v619 = vcombine.low %v615, %v616
      %v621 = vunpack.c.l.s4 1966171168
      %v622 = vunpack.c.0.s8 %v621
      %v623 = vlaneseq
      %v624 = vshrl.u32 %v623, 7
      %v625 = vsub.s32 %v622, %v624
      %v626 = vrot.slane %v619, %v625
      %v628 = vunpack.c.l.s4 1966171168
      %v629 = vunpack.c.0.s8 %v628
      %v630 = vlaneseq
      %v631 = vshrl.u32 %v630, 7
      %v632 = vsub.s32 %v629, %v631
      %v633 = vrot.slane %v626, %v632
      %v635 = vlaneseq
      %vm636 = vcmp.ge.s32.totalorder %v635, 0
      %vm637 = vcmp.lt.s32.totalorder %v635, 256
      %vm638 = vmand %vm636, %vm637
      %639 = vst.msk [vmem:[%s225] sm:$0x3] %vm638, %v633
      %s640 = smul.u32 2, %s17
      %p641 = scmp.lt.s32.totalorder %s640, 3
      %s642 = scalar_select %p641, %s640, 3
      %s643 = scalar_lea.vmem %s5, %s642
      // Predicated region
      $region41: #{_critic_forward.1} parent=39 // pred_check
        %p644 = pneg %p145
      $region42: #{_critic_forward.1} parent=39 // pred_check_branch
        %646 = sbr.rel (%p644) target = $region44
      $region43: #{_critic_forward.1} parent=39 // pred_region
        %s647 = smul.u32 2, %s17
      $region44: #{_critic_forward.1} parent=39 // pred_fallthru
        _
    $region40: #{_critic_forward.1} parent=5 // pred_fallthru
      _
    %p648 = scmp.le.s32.totalorder 2, %s12
    // Predicated region
    $region45: #{_critic_forward.1} parent=5 // pred_check
      %p649 = pneg %p648
    $region46: #{_critic_forward.1} parent=5 // pred_check_branch
      %651 = sbr.rel (%p649) target = $region48
    $region47: #{_critic_forward.1} parent=5 // pred_region
      %s652 = ssub.s32 %s12, 2
      // Predicated region
      $region49: #{_critic_forward.1} parent=47 // pred_check
        %p653 = pneg %p151
      $region50: #{_critic_forward.1} parent=47 // pred_check_branch
        %655 = sbr.rel (%p653) target = $region52
      $region51: #{_critic_forward.1} parent=47 // pred_region
        %s656 = smul.u32 2, %s18
        %p657 = scmp.lt.s32.totalorder %s656, 3
        %s658 = scalar_select %p657, %s656, 3
        %s659 = scalar_lea.vmem %s5, %s658
      $region52: #{_critic_forward.1} parent=47 // pred_fallthru
        _
    $region48: #{_critic_forward.1} parent=5 // pred_fallthru
      _
  $region6: #{_critic_forward.1} parent=0 // loop_footer
    %s16 = sadd.s32 1, %s12
  $region7: #{_critic_forward.1} parent=0 // loop_footer_branch
    %11 = sbr.rel target = $region3
  $region8: #{_critic_forward.1} parent=0 // loop_exit
    _

</llo_original>
